<compile_context>
chip_gen: v7x
topology: tpu7x:2x2x1
jax: 0.10.0
libtpu: 0.0.40
codegen_flags: <defaults>
</compile_context>

<pallas_src>
import jax
import jax.numpy as jnp
from jax.experimental import pallas as pl
from jax.experimental.pallas import tpu as pltpu


def _relu_kernel(x_ref, o_ref):
    # Elementwise hot path: torch.clamp(input, 0) == max(x, 0).
    o_ref[...] = jnp.maximum(x_ref[...], jnp.zeros((), x_ref.dtype))


_LANE_CANDIDATES = (4096, 2048, 1024, 512, 256, 128)


def _choose_lanes(n: int):
    """Widest lane dim (multiple of 128) dividing n, preferring >= 8 rows."""
    best_any = None
    for lanes in _LANE_CANDIDATES:
        if n % lanes == 0:
            if best_any is None:
                best_any = lanes
            if n // lanes >= 8:  # full sublane utilization too
                return lanes
    return best_any  # None -> element count not a multiple of 128


def _tiling_config():
    """(target_block_bytes, vmem_limit_bytes or None) for the local TPU gen."""
    kind = ""
    try:
        kind = jax.devices()[0].device_kind.lower()
    except Exception:  # pragma: no cover - defensive; fall through to default
        pass
    if "v7" in kind:
        # 3.2 TB/s per TC -> 8 MiB blocks keep per-step overhead ~7%.
        # 2 arrays x 2 pipeline buffers x 8 MiB = 32 MiB sits exactly at the
        # default scoped limit, so raise it (64 MiB physical per TC).
        return 8 << 20, 40 << 20
    if "v6" in kind:
        # 2 x 2 x 4 MiB = 16 MiB fits the 32 MiB default scoped VMEM.
        return 4 << 20, None
    if "v5" in kind:
        # v5e default scoped VMEM is 16 MiB: stay at 2 MiB blocks (8 MiB I/O);
        # at ~0.82 TB/s the per-step overhead is already only ~7%.
        return 2 << 20, None
    # Unknown generation: conservative default.
    return 2 << 20, None


def _relu_2d(x2: jax.Array, *, donate_input: bool = False) -> jax.Array:
    """Run the Pallas ReLU kernel over a (rows, lanes) view, lanes % 128 == 0."""
    rows, lanes = x2.shape
    dtype = x2.dtype
    itemsize = jnp.dtype(dtype).itemsize
    n = rows * lanes

    target_block_bytes, vmem_limit = _tiling_config()

    # Sublane packing multiple: 8 (32-bit), 16 (bf16/f16), 32 (int8/fp8).
    sub_mult = max(8, 32 // itemsize)

    rows_per_block = max(1, target_block_bytes // (lanes * itemsize))
    rows_per_block = max(sub_mult, (rows_per_block // sub_mult) * sub_mult)
    tile_r = min(rows, rows_per_block)

    # Megacore (v7x = 2 TensorCores): once the tensor is big enough that the
    # per-step overhead is negligible, make sure there are >= 2 grid steps so
    # the "parallel" axis can actually be split across both cores.
    total_bytes = rows * lanes * itemsize
    if total_bytes > (2 << 20) and rows >= 2 * sub_mult:
        half_rows = max(sub_mult, ((rows // 2) // sub_mult) * sub_mult)
        tile_r = min(tile_r, half_rows)

    grid_r = pl.cdiv(rows, tile_r)  # ragged last block is masked by Pallas

    compiler_kwargs = dict(dimension_semantics=("parallel",))
    if vmem_limit is not None:
        compiler_kwargs["vmem_limit_bytes"] = vmem_limit

    # TODO(synk): optional v7x sweep: pipeline_mode=pl.Buffered(3) on the input
    # spec if a profile shows exposed DMA at step boundaries.
    return pl.pallas_call(
        _relu_kernel,
        out_shape=jax.ShapeDtypeStruct((rows, lanes), dtype),
        grid_spec=pltpu.PrefetchScalarGridSpec(
            num_scalar_prefetch=0,
            grid=(grid_r,),
            in_specs=[pl.BlockSpec((tile_r, lanes), lambda i: (i, 0))],
            out_specs=pl.BlockSpec((tile_r, lanes), lambda i: (i, 0)),
        ),
        compiler_params=pltpu.CompilerParams(**compiler_kwargs),
        cost_estimate=pl.CostEstimate(
            flops=n,
            transcendentals=0,
            bytes_accessed=2 * n * itemsize,
        ),
        input_output_aliases=({0: 0} if donate_input else {}),
    )(x2)


def relu_pallas(x: jax.Array, *, donate_input: bool = False) -> jax.Array:
    """ReLU via Pallas. Any shape/dtype; returns same shape/dtype.

    donate_input=True enables input_output_aliases={0: 0} (ReLU inplace
    semantics) -- only use when the caller no longer needs `x`.
    """
    orig_shape = x.shape
    dtype = x.dtype
    n = x.size
    if n == 0:
        return x

    # NOTE: reshape(-1) is free only for default row-major contiguous layouts;
    # a non-default layout (e.g. straight out of a transpose) would pay a
    # relayout copy here.  Elementwise op, so the re-view itself is safe.
    flat = x.reshape(-1)

    lanes = _choose_lanes(n)
    if lanes is not None:
        rows = n // lanes
        out2 = _relu_2d(flat.reshape(rows, lanes), donate_input=donate_input)
        return out2.reshape(orig_shape)

    # Rare fallback: element count not a multiple of 128.  Run the kernel on
    # the 128-aligned bulk and fix the <=127-element tail with plain VPU max
    # (no full pad + slice round trip).
    n_bulk = (n // 128) * 128
    tail = jnp.maximum(flat[n_bulk:], jnp.zeros((), dtype))
    if n_bulk == 0:
        return tail.reshape(orig_shape)
    bulk_lanes = _choose_lanes(n_bulk) or 128
    bulk = _relu_2d(
        flat[:n_bulk].reshape(n_bulk // bulk_lanes, bulk_lanes),
        donate_input=donate_input,
    )
    return jnp.concatenate([bulk.reshape(-1), tail]).reshape(orig_shape)


if __name__ == "__main__":
    key = jax.random.PRNGKey(0)

    # NCHW input matching the PyTorch convention; small shape.
    x = jax.random.normal(key, (2, 4, 16, 16), dtype=jnp.float32)
    y = jax.block_until_ready(relu_pallas(x))
    y_ref = jnp.maximum(x, 0.0)
    assert y.shape == x.shape and y.dtype == x.dtype
    assert jnp.allclose(y, y_ref), "Pallas ReLU mismatch vs reference"

    # Exercise the non-128-multiple fallback paths (bulk+tail, tail-only).
    for shape in [(5, 37), (3, 5, 7)]:
        key, sub = jax.random.split(key)
        xt = jax.random.normal(sub, shape, dtype=jnp.float32)
        yt = jax.block_until_ready(relu_pallas(xt))
        assert yt.shape == xt.shape and yt.dtype == xt.dtype
        assert jnp.allclose(yt, jnp.maximum(xt, 0.0)), f"mismatch at {shape}"

    # TODO(synk): backward pass (grad_input zeroed where input < 0) not
    # implemented; only the forward module semantics are required here.
    print("KERNEL_OK")
</pallas_src>

<mosaic_0001>
module attributes {stable_mosaic.version = 11 : i64} {
  func.func @_relu_kernel(%arg0: i32, %arg1: memref<8x256xf32, #tpu.memory_space<vmem>>, %arg2: memref<8x256xf32, #tpu.memory_space<vmem>>) attributes {dimension_semantics = [#tpu.dimension_semantics<parallel>], iteration_bounds = array<i64: 1>, scalar_prefetch = 0 : i64, scratch_operands = 0 : i64, tpu.core_type = #tpu.core_type<tc>, window_params = [{transform_indices = @transform_0, window_bounds = array<i64: 8, 256>}, {transform_indices = @transform_1, window_bounds = array<i64: 8, 256>}]} {
    %c0 = arith.constant 0 : index
    %c0_0 = arith.constant 0 : index
    %0 = vector.load %arg1[%c0, %c0_0] : memref<8x256xf32, #tpu.memory_space<vmem>>, vector<8x256xf32>
    %cst = arith.constant 0.000000e+00 : f32
    %1 = vector.broadcast %cst : f32 to vector<8x256xf32>
    %2 = arith.maximumf %0, %1 : vector<8x256xf32>
    %c0_1 = arith.constant 0 : index
    %c0_2 = arith.constant 0 : index
    %3 = vector.load %arg2[%c0_1, %c0_2] : memref<8x256xf32, #tpu.memory_space<vmem>>, vector<8x256xf32>
    tpu.vector_store %arg2[%c0_1, %c0_2], %2 {strides = array<i32>} : memref<8x256xf32, #tpu.memory_space<vmem>>, vector<8x256xf32>,
    return
  }
  func.func @transform_0(%arg0: i32) -> (i32, i32) {
    %c0_i32 = arith.constant 0 : i32
    %c0_i32_0 = arith.constant 0 : i32
    return %arg0, %c0_i32 : i32, i32
  }
  func.func @transform_1(%arg0: i32) -> (i32, i32) {
    %c0_i32 = arith.constant 0 : i32
    %c0_i32_0 = arith.constant 0 : i32
    return %arg0, %c0_i32 : i32, i32
  }
}

</mosaic_0001>

<llo_original>
// kernel: tpu_custom_call.1
$region0: #{tpu_custom_call.1}
  #allocation0 [shape = 'u32[]', space=smem, size = 0x4, offset = 0x4, fixed_abs, tag = 'smem constant byte address 0x4 - core index']
  #allocation1 [shape = 'u32[144,128]{1,0:T(1,128)}', space=vmem, size = 0x12000, scoped, tag = 'internal scratch']
  %s0 = inlined_call_operand.hbm [shape: f32[8,256], index: 0, kind: input, shape index: {}]
  %s1 = inlined_call_operand.hbm [shape: f32[8,256], index: 1, kind: output, shape index: {}]
  %s2 = sld [smem:[#allocation0]]
  $region18: #{tpu_custom_call.1} parent=0
    _
  %s4 = ssub.s32 1, %s2
  %s5 = scalar_select 0, %s4, %s2
  $region1: #{tpu_custom_call.1} parent=0
    #allocation2 [shape = 'u8[8192]{0}', space=vmem, size = 0x2000, scoped, tag = 'input window, operand 0, single buffered']
    #allocation3 [shape = 's32[1]{0}', space=sflag, size = 0x4, scoped, tag = 'scoped memory for tpu_custom_call.1']
    #allocation4 [shape = 's32[1]{0}', space=sflag, size = 0x4, scoped, tag = 'scoped memory for tpu_custom_call.1']
    #allocation5 [shape = 'u8[8192]{0}', space=vmem, size = 0x2000, scoped, tag = 'output window, operand 0, single buffered']
    %6 = vsyncpa [#allocation3], 0
    %7 = vsyncpa [#allocation4], 0
    // Predicated region
    $region2: #{tpu_custom_call.1} parent=1 // pred_check
      _
    $region3: #{tpu_custom_call.1} parent=1 // pred_check_branch
      %9 = sbr.rel (0) target = $region5
    $region4: #{tpu_custom_call.1} parent=1 // pred_region
      %s11 = ssub.s32 256, 256
      %12 = vsyncadd [#allocation3], %s11
      %s14 = sshll.u32 [#allocation2], 4
      %s15 = int_to_ptr.vmem [resolvable:$true] %s14
      %17 = dma.hbm_to_vmem [thread:$0]  %s0, 256, %s15, [#allocation3]
    $region5: #{tpu_custom_call.1} parent=1 // pred_fallthru
      _
    // Predicated region
    $region6: #{tpu_custom_call.1} parent=1 // pred_check
      _
    $region7: #{tpu_custom_call.1} parent=1 // pred_check_branch
      %19 = sbr.rel (0) target = $region9
    $region8: #{tpu_custom_call.1} parent=1 // pred_region
      %20 = dma.done [#allocation3], 256
    $region9: #{tpu_custom_call.1} parent=1 // pred_fallthru
      _
    %v21 = vld [vmem:[#allocation2] sm:$0xff]
    %v22 = vld [vmem:[#allocation2 + $0x8] sm:$0xff]
    %v23 = vmax.f32 %v21, 0.0
    %v24 = vmax.f32 %v22, 0.0
    %25 = vst [vmem:[#allocation5] sm:$0xff] %v23
    %26 = vst [vmem:[#allocation5 + $0x8] sm:$0xff] %v24
    // Predicated region
    $region10: #{tpu_custom_call.1} parent=1 // pred_check
      _
    $region11: #{tpu_custom_call.1} parent=1 // pred_check_branch
      %28 = sbr.rel (0) target = $region13
    $region12: #{tpu_custom_call.1} parent=1 // pred_region
      %s30 = ssub.s32 256, 256
      %31 = vsyncadd [#allocation4], %s30
      %s33 = sshll.u32 [#allocation5], 4
      %s34 = int_to_ptr.vmem [resolvable:$true] %s33
      %36 = dma.vmem_to_hbm [thread:$0]  %s34, 256, %s1, [#allocation4]
    $region13: #{tpu_custom_call.1} parent=1 // pred_fallthru
      _
    // Predicated region
    $region14: #{tpu_custom_call.1} parent=1 // pred_check
      _
    $region15: #{tpu_custom_call.1} parent=1 // pred_check_branch
      %38 = sbr.rel (0) target = $region17
    $region16: #{tpu_custom_call.1} parent=1 // pred_region
      %39 = dma.done [#allocation4], 256
    $region17: #{tpu_custom_call.1} parent=1 // pred_fallthru
      _
    %40 = vsyncpa [#allocation3], 1
    %41 = vsyncpa [#allocation4], 1

</llo_original>
